<compile_context>
chip_gen: v7x
topology: tpu7x:2x2x1
jax: 0.10.0
libtpu: 0.0.40
codegen_flags: <defaults>
</compile_context>

<pallas_src>
import jax
import jax.numpy as jnp
from jax import lax
from jax.experimental import pallas as pl
from jax.experimental.pallas import tpu as pltpu

BN_EPS = 1e-5

# Safe on all generations (<= v7x's 64 MiB physical) and raises v5e's 16 MiB
# default scoped limit.
_VMEM_LIMIT_BYTES = 32 * 1024 * 1024


def _linear1_stats_kernel(x_ref, w1_ref, h_ref, stats_ref):
    """h = x @ W1^T (bf16 MXU, f32 acc) + per-tile BN partial sums."""
    x = x_ref[...].astype(jnp.bfloat16)                      # (tile_n, in_dim)
    # Contract last axes of both operands -> no transposed weight copy / XLU work.
    h = lax.dot_general(x, w1_ref[...], (((1,), (1,)), ((), ())),
                        preferred_element_type=jnp.float32)  # (tile_n, H) f32
    h_ref[...] = h
    s = jnp.sum(h, axis=0, keepdims=True)                    # (1, H)
    sq = jnp.sum(h * h, axis=0, keepdims=True)               # (1, H)
    stats_ref[...] = jnp.concatenate([s, sq], axis=0)[None]  # (1, 2, H)


def _bn_relu_linear2_kernel(h_ref, scale_ref, shift_ref, w2_ref, b2_ref, o_ref):
    """out = max(h*scale + shift, 0) @ W2^T + b2  (BN folded to scale/shift)."""
    h = h_ref[...]                                           # (tile_n, H) f32
    a = jnp.maximum(h * scale_ref[...] + shift_ref[...], 0.0)
    out = lax.dot_general(a.astype(jnp.bfloat16), w2_ref[...],
                          (((1,), (1,)), ((), ())),
                          preferred_element_type=jnp.float32)  # (tile_n, out_dim)
    o_ref[...] = (out + b2_ref[...]).astype(o_ref.dtype)


def prediction_mlp(x, w1, gamma, beta, w2, b2, *, tile_n=128):
    """x: (N, in_dim) f32; torch.nn.Linear weight layouts. Returns (N, out_dim) f32."""
    n, in_dim = x.shape
    hidden = w1.shape[0]
    out_dim = w2.shape[0]

    if n % tile_n != 0:
        tile_n = n  # fall back to a single batch tile for awkward batch sizes

    # Keep the per-grid-step footprint (double-buffered tiles + resident params)
    # comfortably inside the scoped-VMEM budget.
    def _step_bytes(t):
        k1 = (2 * t * in_dim * 4 + 2 * t * hidden * 4
              + 2 * 2 * hidden * 4 + hidden * in_dim * 2)
        k2 = (2 * t * hidden * 4 + 2 * t * out_dim * 4
              + out_dim * hidden * 2 + 2 * (hidden + out_dim) * 4)
        return max(k1, k2)

    while tile_n > 8 and n % (tile_n // 2) == 0 and \
            _step_bytes(tile_n) > (_VMEM_LIMIT_BYTES * 3) // 4:
        tile_n //= 2
    num_tiles = n // tile_n

    # Parameters are resident; ship them to the MXU as bf16 once.
    w1_c = w1.astype(jnp.bfloat16)
    w2_c = w2.astype(jnp.bfloat16)

    compiler_params = pltpu.CompilerParams(
        dimension_semantics=("parallel",),
        vmem_limit_bytes=_VMEM_LIMIT_BYTES)

    # -------- Phase 1: first matmul + per-tile BN partial sums --------------
    h, partial = pl.pallas_call(
        _linear1_stats_kernel,
        out_shape=(jax.ShapeDtypeStruct((n, hidden), jnp.float32),
                   jax.ShapeDtypeStruct((num_tiles, 2, hidden), jnp.float32)),
        grid_spec=pltpu.PrefetchScalarGridSpec(
            num_scalar_prefetch=0,
            grid=(num_tiles,),
            in_specs=[pl.BlockSpec((tile_n, in_dim), lambda i: (i, 0)),
                      pl.BlockSpec((hidden, in_dim), lambda i: (0, 0))],
            out_specs=[pl.BlockSpec((tile_n, hidden), lambda i: (i, 0)),
                       pl.BlockSpec((1, 2, hidden), lambda i: (i, 0, 0))]),
        compiler_params=compiler_params,
    )(x, w1_c)

    # -------- Tiny cross-tile combine + BN affine fold (O(H) work) ----------
    stats = jnp.sum(partial, axis=0)                         # (2, H)
    mean = stats[0] / n
    var = jnp.maximum(stats[1] / n - mean * mean, 0.0)       # biased variance
    inv = gamma.reshape(-1) * lax.rsqrt(var + BN_EPS)
    scale = inv.reshape(1, hidden).astype(jnp.float32)
    shift = (beta.reshape(-1) - mean * inv).reshape(1, hidden).astype(jnp.float32)

    # -------- Phase 2: fused BN(scale/shift) + ReLU + second matmul ----------
    out = pl.pallas_call(
        _bn_relu_linear2_kernel,
        out_shape=jax.ShapeDtypeStruct((n, out_dim), jnp.float32),
        grid_spec=pltpu.PrefetchScalarGridSpec(
            num_scalar_prefetch=0,
            grid=(num_tiles,),
            in_specs=[pl.BlockSpec((tile_n, hidden), lambda i: (i, 0)),
                      pl.BlockSpec((1, hidden), lambda i: (0, 0)),
                      pl.BlockSpec((1, hidden), lambda i: (0, 0)),
                      pl.BlockSpec((out_dim, hidden), lambda i: (0, 0)),
                      pl.BlockSpec((1, out_dim), lambda i: (0, 0))],
            out_specs=pl.BlockSpec((tile_n, out_dim), lambda i: (i, 0))),
        compiler_params=compiler_params,
    )(h, scale, shift, w2_c, b2)
    return out


def init_params(key, in_dim, hidden_dim, out_dim):
    """Deterministic synthetic parameters with PyTorch nn.Linear shapes."""
    k1, k2, k3, k4, k5 = jax.random.split(key, 5)
    w1 = jax.random.normal(k1, (hidden_dim, in_dim), jnp.float32) * (1.0 / jnp.sqrt(in_dim))
    # Non-trivial BN affine params to exercise the scale/shift fold.
    gamma = 1.0 + 0.1 * jax.random.normal(k4, (1, hidden_dim), jnp.float32)
    beta = 0.1 * jax.random.normal(k5, (1, hidden_dim), jnp.float32)
    w2 = jax.random.normal(k2, (out_dim, hidden_dim), jnp.float32) * (1.0 / jnp.sqrt(hidden_dim))
    b2 = jax.random.normal(k3, (1, out_dim), jnp.float32) * 0.01
    return w1, gamma, beta, w2, b2


def reference(x, w1, gamma, beta, w2, b2):
    """Pure-JAX f32 reference matching PyTorch training-mode forward."""
    h = x @ w1.T
    mean = jnp.mean(h, axis=0, keepdims=True)
    var = jnp.mean((h - mean) ** 2, axis=0, keepdims=True)
    h = (h - mean) / jnp.sqrt(var + BN_EPS) * gamma + beta
    h = jnp.maximum(h, 0.0)
    return h @ w2.T + b2


if __name__ == "__main__":
    # Small but lane/sublane-aligned shapes (multiples of 8 / 128) so the MXU
    # and stores are not masked-out; two batch tiles exercise the grid.
    N, IN_DIM, HIDDEN_DIM, OUT_DIM = 256, 128, 256, 128

    key = jax.random.PRNGKey(0)
    kx, kp = jax.random.split(key)
    x = jax.random.normal(kx, (N, IN_DIM), jnp.float32)
    w1, gamma, beta, w2, b2 = init_params(kp, IN_DIM, HIDDEN_DIM, OUT_DIM)

    out = jax.block_until_ready(prediction_mlp(x, w1, gamma, beta, w2, b2))
    ref = reference(x, w1, gamma, beta, w2, b2)

    assert out.shape == (N, OUT_DIM)
    # bf16 MXU inputs with f32 accumulation (and one-pass variance) => loose
    # but safe tolerance versus the pure-f32 reference.
    assert jnp.allclose(out, ref, atol=3e-2, rtol=3e-2), "mismatch vs reference"

    print("KERNEL_OK")
</pallas_src>

<mosaic_0001>
module attributes {stable_mosaic.version = 11 : i64} {
  func.func @_linear1_stats_kernel(%arg0: i32, %arg1: memref<128x128xf32, #tpu.memory_space<vmem>>, %arg2: memref<256x128xbf16, #tpu.memory_space<vmem>>, %arg3: memref<128x256xf32, #tpu.memory_space<vmem>>, %arg4: memref<1x2x256xf32, #tpu.memory_space<vmem>>) attributes {dimension_semantics = [#tpu.dimension_semantics<parallel>], iteration_bounds = array<i64: 2>, scalar_prefetch = 0 : i64, scratch_operands = 0 : i64, tpu.core_type = #tpu.core_type<tc>, window_params = [{transform_indices = @transform_0, window_bounds = array<i64: 128, 128>}, {pipeline_mode = #tpu.pipeline_mode<synchronous>, transform_indices = @transform_1, window_bounds = array<i64: 256, 128>}, {transform_indices = @transform_2, window_bounds = array<i64: 128, 256>}, {transform_indices = @transform_3, window_bounds = array<i64: 1, 2, 256>}]} {
    %c0 = arith.constant 0 : index
    %c0_0 = arith.constant 0 : index
    %0 = vector.load %arg1[%c0, %c0_0] : memref<128x128xf32, #tpu.memory_space<vmem>>, vector<128x128xf32>
    %1 = arith.truncf %0 : vector<128x128xf32> to vector<128x128xbf16>
    %c0_1 = arith.constant 0 : index
    %c0_2 = arith.constant 0 : index
    %2 = vector.load %arg2[%c0_1, %c0_2] : memref<256x128xbf16, #tpu.memory_space<vmem>>, vector<256x128xbf16>
    %cst = arith.constant dense<0.000000e+00> : vector<128x256xf32>
    %3 = tpu.matmul %1, %2, %cst {dimension_numbers = #tpu.dot_dimension_numbers<[1], [1], [0], [0], [0, 0, 1, 0], [], []>} : vector<128x128xbf16>, vector<256x128xbf16>, vector<128x256xf32> -> vector<128x256xf32>
    %c0_3 = arith.constant 0 : index
    %c0_4 = arith.constant 0 : index
    %4 = vector.load %arg3[%c0_3, %c0_4] : memref<128x256xf32, #tpu.memory_space<vmem>>, vector<128x256xf32>
    tpu.vector_store %arg3[%c0_3, %c0_4], %3 {strides = array<i32>} : memref<128x256xf32, #tpu.memory_space<vmem>>, vector<128x256xf32>,
    %cst_5 = arith.constant dense<0.000000e+00> : vector<256xf32>
    %5 = vector.multi_reduction <add>, %3, %cst_5 [0] : vector<128x256xf32> to vector<256xf32>
    %6 = vector.shape_cast %5 : vector<256xf32> to vector<1x256xf32>
    %7 = arith.mulf %3, %3 : vector<128x256xf32>
    %cst_6 = arith.constant dense<0.000000e+00> : vector<256xf32>
    %8 = vector.multi_reduction <add>, %7, %cst_6 [0] : vector<128x256xf32> to vector<256xf32>
    %9 = vector.shape_cast %8 : vector<256xf32> to vector<1x256xf32>
    %10 = tpu.concatenate %6, %9 in 0 : vector<1x256xf32>, vector<1x256xf32> -> vector<2x256xf32>
    %11 = vector.shape_cast %10 : vector<2x256xf32> to vector<1x2x256xf32>
    %c0_7 = arith.constant 0 : index
    %c0_8 = arith.constant 0 : index
    %c0_9 = arith.constant 0 : index
    %12 = vector.load %arg4[%c0_7, %c0_8, %c0_9] : memref<1x2x256xf32, #tpu.memory_space<vmem>>, vector<1x2x256xf32>
    tpu.vector_store %arg4[%c0_7, %c0_8, %c0_9], %11 {strides = array<i32>} : memref<1x2x256xf32, #tpu.memory_space<vmem>>, vector<1x2x256xf32>,
    return
  }
  func.func @transform_0(%arg0: i32) -> (i32, i32) {
    %c0_i32 = arith.constant 0 : i32
    %c0_i32_0 = arith.constant 0 : i32
    return %arg0, %c0_i32 : i32, i32
  }
  func.func @transform_1(%arg0: i32) -> (i32, i32) {
    %c0_i32 = arith.constant 0 : i32
    %c0_i32_0 = arith.constant 0 : i32
    %c0_i32_1 = arith.constant 0 : i32
    return %c0_i32, %c0_i32_0 : i32, i32
  }
  func.func @transform_2(%arg0: i32) -> (i32, i32) {
    %c0_i32 = arith.constant 0 : i32
    %c0_i32_0 = arith.constant 0 : i32
    return %arg0, %c0_i32 : i32, i32
  }
  func.func @transform_3(%arg0: i32) -> (i32, i32, i32) {
    %c0_i32 = arith.constant 0 : i32
    %c0_i32_0 = arith.constant 0 : i32
    %c0_i32_1 = arith.constant 0 : i32
    return %arg0, %c0_i32, %c0_i32_0 : i32, i32, i32
  }
}

</mosaic_0001>

<llo_original>
// kernel: tpu_custom_call.1
$region0: #{tpu_custom_call.1}
  #allocation0 [shape = 'u32[]', space=smem, size = 0x4, offset = 0x4, fixed_abs, tag = 'smem constant byte address 0x4 - core index']
  #allocation1 [shape = 'u32[144,128]{1,0:T(1,128)}', space=vmem, size = 0x12000, scoped, tag = 'internal scratch']
  %s0 = inlined_call_operand.hbm [shape: f32[256,128], index: 0, kind: input, shape index: {}]
  %s1 = inlined_call_operand.hbm [shape: bf16[256,128], index: 1, kind: input, shape index: {}]
  %s2 = inlined_call_operand.hbm [shape: f32[256,256], index: 2, kind: output, shape index: {0}]
  %s3 = inlined_call_operand.hbm [shape: f32[2,2,256], index: 3, kind: output, shape index: {1}]
  %4 = xla_tuple %s2, %s3
  %s5 = sld [smem:[#allocation0]]
  $region57: #{tpu_custom_call.1} parent=0
    _
  %s7 = ssub.s32 1, %s5
  %s8 = scalar_select 0, %s7, %s5
  $region1: #{tpu_custom_call.1} parent=0
    #allocation2 [shape = 'u8[131072]{0}', space=vmem, size = 0x20000, scoped, tag = 'input window, operand 0']
    #allocation3 [shape = 's32[2]{0}', space=sflag, size = 0x8, scoped, tag = 'scoped memory for tpu_custom_call.1']
    #allocation4 [shape = 's32[2]{0}', space=sflag, size = 0x8, scoped, tag = 'scoped memory for tpu_custom_call.1']
    #allocation5 [shape = 'u8[65536]{0}', space=vmem, size = 0x10000, scoped, tag = 'input window, operand 1, single buffered']
    #allocation6 [shape = 's32[1]{0}', space=sflag, size = 0x4, scoped, tag = 'scoped memory for tpu_custom_call.1']
    #allocation7 [shape = 'u8[262144]{0}', space=vmem, size = 0x40000, scoped, tag = 'output window, operand 0']
    #allocation8 [shape = 'u8[4096]{0}', space=vmem, size = 0x1000, scoped, tag = 'output window, operand 1']
    #allocation9 [shape = 's32[2]{0}', space=sflag, size = 0x8, scoped, tag = 'scoped memory for tpu_custom_call.1']
    %9 = vsyncpa [#allocation3], 0
    %s10 = scalar_lea.sflag [#allocation3], 1
    %11 = vsyncpa %s10, 0
    %12 = vsyncpa [#allocation6], 0
    %13 = vsyncpa [#allocation4], 0
    %s14 = scalar_lea.sflag [#allocation4], 1
    %15 = vsyncpa %s14, 0
    %16 = vsyncpa [#allocation9], 0
    %s17 = scalar_lea.sflag [#allocation9], 1
    %18 = vsyncpa %s17, 0
    loop: start=0, step=1, limit=4
    $region2: #{tpu_custom_call.1} parent=1 // loop_pre_header
      _
    $region3: #{tpu_custom_call.1} parent=1 // loop_header
      %s20 = sphi 0, %s24
      %p21 = scmp.ge.s32.totalorder %s20, 4
      %s30 = sphi 0, %s32
      %s33 = sphi 0, %s30
      %s34 = sphi 0, %s33
      %s50 = sphi 0, %s34
      %s54 = sphi 0, %s54
      %s56 = sphi 0, %s54
      %s57 = sphi 0, %s56
      %s71 = sphi 0, %s57
      %s77 = sphi 0, %s79
      %s80 = sphi 0, %s77
      %s81 = sphi 0, %s80
      %s97 = sphi 0, %s81
      %s103 = sphi 0, %s105
      %s106 = sphi 0, %s103
      %s107 = sphi 0, %s106
      %s123 = sphi 0, %s107
    $region4: #{tpu_custom_call.1} parent=1 // loop_header_branch
      %23 = sbr.rel (%p21) target = $region8
    $region5: #{tpu_custom_call.1} parent=1 // loop_body
      %s25 = ssub.s32 %s20, 1
      %s26 = ssub.s32 %s20, 2
      %s27 = sadd.s32 %s20, 1
      %s28 = ssub.s32 %s20, %s27
      %p29 = scmp.eq.s32.totalorder %s28, 0
      %s31 = sadd.s32 %s30, 1
      %s32 = scalar_select %p29, %s30, %s31
      %p35 = pneg %p29
      %p36 = scmp.eq.s32.totalorder %s20, 1
      %p37 = por %p35, %p36
      %p38 = scmp.ne.s32.totalorder %s30, %s33
      %p39 = scmp.eq.s32.totalorder %s20, 0
      %p40 = por %p38, %p39
      %p41 = scmp.ne.s32.totalorder %s30, %s33
      %p42 = scmp.eq.s32.totalorder %s25, 1
      %p43 = por %p41, %p42
      %p44 = scmp.ne.s32.totalorder %s33, %s34
      %p45 = scmp.eq.s32.totalorder %s25, 0
      %p46 = por %p44, %p45
      %p47 = scmp.ne.s32.totalorder %s33, %s34
      %p48 = scmp.eq.s32.totalorder %s26, 1
      %p49 = por %p47, %p48
      %p51 = scmp.ne.s32.totalorder %s34, %s50
      %p52 = scmp.eq.s32.totalorder %s26, 0
      %p53 = por %p51, %p52
      %s55 = sadd.s32 %s54, 1
      %p58 = scmp.eq.s32.totalorder %s20, 1
      %p59 = scmp.ne.s32.totalorder %s54, %s56
      %p60 = scmp.eq.s32.totalorder %s20, 0
      %p61 = por %p59, %p60
      %p62 = scmp.ne.s32.totalorder %s54, %s56
      %p63 = scmp.eq.s32.totalorder %s25, 1
      %p64 = por %p62, %p63
      %p65 = scmp.ne.s32.totalorder %s56, %s57
      %p66 = scmp.eq.s32.totalorder %s25, 0
      %p67 = por %p65, %p66
      %p68 = scmp.ne.s32.totalorder %s56, %s57
      %p69 = scmp.eq.s32.totalorder %s26, 1
      %p70 = por %p68, %p69
      %p72 = scmp.ne.s32.totalorder %s57, %s71
      %p73 = scmp.eq.s32.totalorder %s26, 0
      %p74 = por %p72, %p73
      %s75 = ssub.s32 %s20, %s27
      %p76 = scmp.eq.s32.totalorder %s75, 0
      %s78 = sadd.s32 %s77, 1
      %s79 = scalar_select %p76, %s77, %s78
      %p82 = pneg %p76
      %p83 = scmp.eq.s32.totalorder %s20, 1
      %p84 = por %p82, %p83
      %p85 = scmp.ne.s32.totalorder %s77, %s80
      %p86 = scmp.eq.s32.totalorder %s20, 0
      %p87 = por %p85, %p86
      %p88 = scmp.ne.s32.totalorder %s77, %s80
      %p89 = scmp.eq.s32.totalorder %s25, 1
      %p90 = por %p88, %p89
      %p91 = scmp.ne.s32.totalorder %s80, %s81
      %p92 = scmp.eq.s32.totalorder %s25, 0
      %p93 = por %p91, %p92
      %p94 = scmp.ne.s32.totalorder %s80, %s81
      %p95 = scmp.eq.s32.totalorder %s26, 1
      %p96 = por %p94, %p95
      %p98 = scmp.ne.s32.totalorder %s81, %s97
      %p99 = scmp.eq.s32.totalorder %s26, 0
      %p100 = por %p98, %p99
      %s101 = ssub.s32 %s20, %s27
      %p102 = scmp.eq.s32.totalorder %s101, 0
      %s104 = sadd.s32 %s103, 1
      %s105 = scalar_select %p102, %s103, %s104
      %p108 = pneg %p102
      %p109 = scmp.eq.s32.totalorder %s20, 1
      %p110 = por %p108, %p109
      %p111 = scmp.ne.s32.totalorder %s103, %s106
      %p112 = scmp.eq.s32.totalorder %s20, 0
      %p113 = por %p111, %p112
      %p114 = scmp.ne.s32.totalorder %s103, %s106
      %p115 = scmp.eq.s32.totalorder %s25, 1
      %p116 = por %p114, %p115
      %p117 = scmp.ne.s32.totalorder %s106, %s107
      %p118 = scmp.eq.s32.totalorder %s25, 0
      %p119 = por %p117, %p118
      %p120 = scmp.ne.s32.totalorder %s106, %s107
      %p121 = scmp.eq.s32.totalorder %s26, 1
      %p122 = por %p120, %p121
      %p124 = scmp.ne.s32.totalorder %s107, %s123
      %p125 = scmp.eq.s32.totalorder %s26, 0
      %p126 = por %p124, %p125
      %p127 = scmp.le.s32.totalorder 1, %s20
      %p128 = scmp.lt.s32.totalorder %s20, 3
      %p129 = pnand %p127, %p128
      %p130 = pneg %p129
      // Predicated region
      $region9: #{tpu_custom_call.1} parent=5 // pred_check
        _
      $region10: #{tpu_custom_call.1} parent=5 // pred_check_branch
        %132 = sbr.rel (%p129) target = $region12
      $region11: #{tpu_custom_call.1} parent=5 // pred_region
        %s133 = ssub.s32 %s20, 1
        // Predicated region
        $region13: #{tpu_custom_call.1} parent=11 // pred_check
          %p134 = pneg %p67
        $region14: #{tpu_custom_call.1} parent=11 // pred_check_branch
          %136 = sbr.rel (%p134) target = $region16
        $region15: #{tpu_custom_call.1} parent=11 // pred_region
          %s138 = ssub.s32 2048, 2048
          %139 = vsyncadd [#allocation6], %s138
          %s140 = sshll.u32 [#allocation5], 4
          %s141 = int_to_ptr.vmem [resolvable:$true] %s140
          %146 = dma.hbm_to_vmem [thread:$0]  %s1, 2048, %s141, [#allocation6], 64, 64, 4
        $region16: #{tpu_custom_call.1} parent=11 // pred_fallthru
          _
      $region12: #{tpu_custom_call.1} parent=5 // pred_fallthru
        _
      %p147 = scmp.lt.s32.totalorder %s20, 2
      // Predicated region
      $region17: #{tpu_custom_call.1} parent=5 // pred_check
        %p148 = pneg %p147
      $region18: #{tpu_custom_call.1} parent=5 // pred_check_branch
        %150 = sbr.rel (%p148) target = $region20
      $region19: #{tpu_custom_call.1} parent=5 // pred_region
        // Predicated region
        $region21: #{tpu_custom_call.1} parent=19 // pred_check
          %p151 = pneg %p40
        $region22: #{tpu_custom_call.1} parent=19 // pred_check_branch
          %153 = sbr.rel (%p151) target = $region24
        $region23: #{tpu_custom_call.1} parent=19 // pred_region
          %s154 = sand.u32 %s30, 1
          %s155 = scalar_lea.sflag [#allocation3], %s154
          %s156 = sand.u32 %s30, 1
          %s157 = smul.addr %s156, 128
          %s158 = scalar_lea.vmem [#allocation2], %s157
          %s159 = smul.u32 16, %s20
          %s161 = ssub.s32 2048, 2048
          %162 = vsyncadd %s155, %s161
          %s163 = smul.addr %s159, 128
          %s164 = scalar_lea.hbm %s0, %s163
          %s165 = sshll.u32 %s158, 4
          %s166 = int_to_ptr.vmem [resolvable:$true] %s165
          %171 = dma.hbm_to_vmem [thread:$0]  %s164, 2048, %s166, %s155, 128, 128, 8
        $region24: #{tpu_custom_call.1} parent=19 // pred_fallthru
          _
      $region20: #{tpu_custom_call.1} parent=5 // pred_fallthru
        _
      %p172 = scmp.le.s32.totalorder 1, %s20
      %p173 = scmp.lt.s32.totalorder %s20, 3
      %p174 = pnand %p172, %p173
      %p175 = pneg %p174
      // Predicated region
      $region25: #{tpu_custom_call.1} parent=5 // pred_check
        _
      $region26: #{tpu_custom_call.1} parent=5 // pred_check_branch
        %177 = sbr.rel (%p174) target = $region28
      $region27: #{tpu_custom_call.1} parent=5 // pred_region
        %s178 = ssub.s32 %s20, 1
        %s179 = sand.u32 %s33, 1
        %s180 = scalar_lea.sflag [#allocation3], %s179
        %s181 = sand.u32 %s33, 1
        %s182 = smul.addr %s181, 128
        %s183 = scalar_lea.vmem [#allocation2], %s182
        // Predicated region
        $region29: #{tpu_custom_call.1} parent=27 // pred_check
          %p184 = pneg %p46
        $region30: #{tpu_custom_call.1} parent=27 // pred_check_branch
          %186 = sbr.rel (%p184) target = $region32
        $region31: #{tpu_custom_call.1} parent=27 // pred_region
          %187 = dma.done %s180, 2048
        $region32: #{tpu_custom_call.1} parent=27 // pred_fallthru
          _
        // Predicated region
        $region33: #{tpu_custom_call.1} parent=27 // pred_check
          %p188 = pneg %p67
        $region34: #{tpu_custom_call.1} parent=27 // pred_check_branch
          %190 = sbr.rel (%p188) target = $region36
        $region35: #{tpu_custom_call.1} parent=27 // pred_region
          %191 = dma.done [#allocation6], 2048
        $region36: #{tpu_custom_call.1} parent=27 // pred_fallthru
          _
        %s192 = sand.u32 %s33, 1
        %s193 = scalar_lea.sflag [#allocation3], %s192
        %s194 = sand.u32 %s33, 1
        %s195 = smul.addr %s194, 128
        %s196 = scalar_lea.vmem [#allocation2], %s195
        %p197 = pneg %p46
        %p198 = pneg %p43
        %p199 = pneg %p67
        %p200 = pneg %p64
        %p201 = pneg %p93
        %p202 = pneg %p90
        %s203 = sand.u32 %s80, 1
        %s204 = scalar_lea.sflag [#allocation4], %s203
        %s205 = sand.u32 %s80, 1
        %s206 = smul.addr %s205, 256
        %s207 = scalar_lea.vmem [#allocation7], %s206
        %p208 = pneg %p119
        %p209 = pneg %p116
        %s210 = sand.u32 %s106, 1
        %s211 = scalar_lea.sflag [#allocation9], %s210
        %s212 = sand.u32 %s106, 1
        %s213 = smul.addr %s212, 4
        %s214 = scalar_lea.vmem [#allocation8], %s213
        %s215 = smul.u32 16, %s25
        %s216 = smul.u32 16, %s25
        %v218 = vld [vmem:[%s183] sm:$0xff]
        %v219 = vld [vmem:[%s183 + $0x8] sm:$0xff]
        %v220 = vld [vmem:[%s183 + $0x10] sm:$0xff]
        %v221 = vld [vmem:[%s183 + $0x18] sm:$0xff]
        %v222 = vld [vmem:[%s183 + $0x20] sm:$0xff]
        %v223 = vld [vmem:[%s183 + $0x28] sm:$0xff]
        %v224 = vld [vmem:[%s183 + $0x30] sm:$0xff]
        %v225 = vld [vmem:[%s183 + $0x38] sm:$0xff]
        %v226 = vld [vmem:[%s183 + $0x40] sm:$0xff]
        %v227 = vld [vmem:[%s183 + $0x48] sm:$0xff]
        %v228 = vld [vmem:[%s183 + $0x50] sm:$0xff]
        %v229 = vld [vmem:[%s183 + $0x58] sm:$0xff]
        %v230 = vld [vmem:[%s183 + $0x60] sm:$0xff]
        %v231 = vld [vmem:[%s183 + $0x68] sm:$0xff]
        %v232 = vld [vmem:[%s183 + $0x70] sm:$0xff]
        %v233 = vld [vmem:[%s183 + $0x78] sm:$0xff]
        %v234 = vpack.c.bf16 %v219, %v218
        %v235 = vpack.c.bf16 %v221, %v220
        %v236 = vpack.c.bf16 %v223, %v222
        %v237 = vpack.c.bf16 %v225, %v224
        %v238 = vpack.c.bf16 %v227, %v226
        %v239 = vpack.c.bf16 %v229, %v228
        %v240 = vpack.c.bf16 %v231, %v230
        %v241 = vpack.c.bf16 %v233, %v232
        %v242 = vld [vmem:[#allocation5] sm:$0xf]
        %v243 = vld [vmem:[#allocation5 + $0x4] sm:$0xf]
        %v244 = vld [vmem:[#allocation5 + $0x8] sm:$0xf]
        %v245 = vld [vmem:[#allocation5 + $0xc] sm:$0xf]
        %v246 = vld [vmem:[#allocation5 + $0x10] sm:$0xf]
        %v247 = vld [vmem:[#allocation5 + $0x14] sm:$0xf]
        %v248 = vld [vmem:[#allocation5 + $0x18] sm:$0xf]
        %v249 = vld [vmem:[#allocation5 + $0x1c] sm:$0xf]
        %v250 = vld [vmem:[#allocation5 + $0x20] sm:$0xf]
        %v251 = vld [vmem:[#allocation5 + $0x24] sm:$0xf]
        %v252 = vld [vmem:[#allocation5 + $0x28] sm:$0xf]
        %v253 = vld [vmem:[#allocation5 + $0x2c] sm:$0xf]
        %v254 = vld [vmem:[#allocation5 + $0x30] sm:$0xf]
        %v255 = vld [vmem:[#allocation5 + $0x34] sm:$0xf]
        %v256 = vld [vmem:[#allocation5 + $0x38] sm:$0xf]
        %v257 = vld [vmem:[#allocation5 + $0x3c] sm:$0xf]
        %v258 = vld [vmem:[#allocation5 + $0x40] sm:$0xf]
        %v259 = vld [vmem:[#allocation5 + $0x44] sm:$0xf]
        %v260 = vld [vmem:[#allocation5 + $0x48] sm:$0xf]
        %v261 = vld [vmem:[#allocation5 + $0x4c] sm:$0xf]
        %v262 = vld [vmem:[#allocation5 + $0x50] sm:$0xf]
        %v263 = vld [vmem:[#allocation5 + $0x54] sm:$0xf]
        %v264 = vld [vmem:[#allocation5 + $0x58] sm:$0xf]
        %v265 = vld [vmem:[#allocation5 + $0x5c] sm:$0xf]
        %v266 = vld [vmem:[#allocation5 + $0x60] sm:$0xf]
        %v267 = vld [vmem:[#allocation5 + $0x64] sm:$0xf]
        %v268 = vld [vmem:[#allocation5 + $0x68] sm:$0xf]
        %v269 = vld [vmem:[#allocation5 + $0x6c] sm:$0xf]
        %v270 = vld [vmem:[#allocation5 + $0x70] sm:$0xf]
        %v271 = vld [vmem:[#allocation5 + $0x74] sm:$0xf]
        %v272 = vld [vmem:[#allocation5 + $0x78] sm:$0xf]
        %v273 = vld [vmem:[#allocation5 + $0x7c] sm:$0xf]
        %v306 = vunpack.c.l.b16 %v242
        %v307 = vunpack.c.l.b16 %v243
        %v308 = vunpack.c.l.b16 %v244
        %v309 = vunpack.c.l.b16 %v245
        %v310 = vunpack.c.l.b16 %v246
        %v311 = vunpack.c.l.b16 %v247
        %v312 = vunpack.c.l.b16 %v248
        %v313 = vunpack.c.l.b16 %v249
        %v314 = vunpack.c.l.b16 %v250
        %v315 = vunpack.c.l.b16 %v251
        %v316 = vunpack.c.l.b16 %v252
        %v317 = vunpack.c.l.b16 %v253
        %v318 = vunpack.c.l.b16 %v254
        %v319 = vunpack.c.l.b16 %v255
        %v320 = vunpack.c.l.b16 %v256
        %v321 = vunpack.c.l.b16 %v257
        %v322 = vunpack.c.l.b16 %v258
        %v323 = vunpack.c.l.b16 %v259
        %v324 = vunpack.c.l.b16 %v260
        %v325 = vunpack.c.l.b16 %v261
        %v326 = vunpack.c.l.b16 %v262
        %v327 = vunpack.c.l.b16 %v263
        %v328 = vunpack.c.l.b16 %v264
        %v329 = vunpack.c.l.b16 %v265
        %v330 = vunpack.c.l.b16 %v266
        %v331 = vunpack.c.l.b16 %v267
        %v332 = vunpack.c.l.b16 %v268
        %v333 = vunpack.c.l.b16 %v269
        %v334 = vunpack.c.l.b16 %v270
        %v335 = vunpack.c.l.b16 %v271
        %v336 = vunpack.c.l.b16 %v272
        %v337 = vunpack.c.l.b16 %v273
        %v338 = vpack.c.b16 %v307, %v306
        %v339 = vpack.c.b16 %v309, %v308
        %v340 = vpack.c.b16 %v311, %v310
        %v341 = vpack.c.b16 %v313, %v312
        %v342 = vpack.c.b16 %v315, %v314
        %v343 = vpack.c.b16 %v317, %v316
        %v344 = vpack.c.b16 %v319, %v318
        %v345 = vpack.c.b16 %v321, %v320
        %v346 = vpack.c.b16 %v323, %v322
        %v347 = vpack.c.b16 %v325, %v324
        %v348 = vpack.c.b16 %v327, %v326
        %v349 = vpack.c.b16 %v329, %v328
        %v350 = vpack.c.b16 %v331, %v330
        %v351 = vpack.c.b16 %v333, %v332
        %v352 = vpack.c.b16 %v335, %v334
        %v353 = vpack.c.b16 %v337, %v336
        %370 = vmatprep.subr.bf16.mxu0 0
        %371 = vmatpush1.bf16.xpose.msra.mxu0 %v338
        %372 = vmatprep.subr.bf16.mxu0 0
        %373 = vmatpush1.bf16.xpose.msra.mxu0 %v339
        %374 = vmatprep.subr.bf16.mxu0 0
        %375 = vmatpush1.bf16.xpose.msra.mxu0 %v340
        %376 = vmatprep.subr.bf16.mxu0 0
        %377 = vmatpush1.bf16.xpose.msra.mxu0 %v341
        %378 = vmatprep.subr.bf16.mxu0 0
        %379 = vmatpush1.bf16.xpose.msra.mxu0 %v342
        %380 = vmatprep.subr.bf16.mxu0 0
        %381 = vmatpush1.bf16.xpose.msra.mxu0 %v343
        %382 = vmatprep.subr.bf16.mxu0 0
        %383 = vmatpush1.bf16.xpose.msra.mxu0 %v344
        %384 = vmatprep.subr.bf16.mxu0 0
        %385 = vmatpush1.bf16.xpose.msra.mxu0 %v345
        %386 = vmatprep.subr.bf16.mxu0 0
        %387 = vmatpush1.bf16.xpose.msra.mxu0 %v346
        %388 = vmatprep.subr.bf16.mxu0 0
        %389 = vmatpush1.bf16.xpose.msra.mxu0 %v347
        %390 = vmatprep.subr.bf16.mxu0 0
        %391 = vmatpush1.bf16.xpose.msra.mxu0 %v348
        %392 = vmatprep.subr.bf16.mxu0 0
        %393 = vmatpush1.bf16.xpose.msra.mxu0 %v349
        %394 = vmatprep.subr.bf16.mxu0 0
        %395 = vmatpush1.bf16.xpose.msra.mxu0 %v350
        %396 = vmatprep.subr.bf16.mxu0 0
        %397 = vmatpush1.bf16.xpose.msra.mxu0 %v351
        %398 = vmatprep.subr.bf16.mxu0 0
        %399 = vmatpush1.bf16.xpose.msra.mxu0 %v352
        %400 = vmatprep.subr.bf16.mxu0 0
        %401 = vmatpush1.bf16.xpose.msra.mxu0 %v353
        %402 = vmatprep.mubr.bf16.mxu0 0
        %403 = vmatmul.mubr.bf16.gmra.mrb[0].mxu0 %v234
        %v404 = vpop.f32.mrb[0].mxu0
        %v405 = vadd.f32 0.0, %v404
        %v406 = vpop.f32.mrb[0].mxu0
        %v407 = vadd.f32 0.0, %v406
        %v408 = vpop.f32.mrb[0].mxu0
        %v409 = vadd.f32 0.0, %v408
        %v410 = vpop.f32.mrb[0].mxu0
        %v411 = vadd.f32 0.0, %v410
        %412 = vmatprep.mubr.bf16.mxu0 0
        %413 = vmatmul.mubr.bf16.gmra.mrb[0].mxu0 %v235
        %v414 = vpop.f32.mrb[0].mxu0
        %v415 = vadd.f32 0.0, %v414
        %v416 = vpop.f32.mrb[0].mxu0
        %v417 = vadd.f32 0.0, %v416
        %v418 = vpop.f32.mrb[0].mxu0
        %v419 = vadd.f32 0.0, %v418
        %v420 = vpop.f32.mrb[0].mxu0
        %v421 = vadd.f32 0.0, %v420
        %422 = vmatprep.mubr.bf16.mxu0 0
        %423 = vmatmul.mubr.bf16.gmra.mrb[0].mxu0 %v236
        %v424 = vpop.f32.mrb[0].mxu0
        %v425 = vadd.f32 0.0, %v424
        %v426 = vpop.f32.mrb[0].mxu0
        %v427 = vadd.f32 0.0, %v426
        %v428 = vpop.f32.mrb[0].mxu0
        %v429 = vadd.f32 0.0, %v428
        %v430 = vpop.f32.mrb[0].mxu0
        %v431 = vadd.f32 0.0, %v430
        %432 = vmatprep.mubr.bf16.mxu0 0
        %433 = vmatmul.mubr.bf16.gmra.mrb[0].mxu0 %v237
        %v434 = vpop.f32.mrb[0].mxu0
        %v435 = vadd.f32 0.0, %v434
        %v436 = vpop.f32.mrb[0].mxu0
        %v437 = vadd.f32 0.0, %v436
        %v438 = vpop.f32.mrb[0].mxu0
        %v439 = vadd.f32 0.0, %v438
        %v440 = vpop.f32.mrb[0].mxu0
        %v441 = vadd.f32 0.0, %v440
        %442 = vmatprep.mubr.bf16.mxu0 0
        %443 = vmatmul.mubr.bf16.gmra.mrb[0].mxu0 %v238
        %v444 = vpop.f32.mrb[0].mxu0
        %v445 = vadd.f32 0.0, %v444
        %v446 = vpop.f32.mrb[0].mxu0
        %v447 = vadd.f32 0.0, %v446
        %v448 = vpop.f32.mrb[0].mxu0
        %v449 = vadd.f32 0.0, %v448
        %v450 = vpop.f32.mrb[0].mxu0
        %v451 = vadd.f32 0.0, %v450
        %452 = vmatprep.mubr.bf16.mxu0 0
        %453 = vmatmul.mubr.bf16.gmra.mrb[0].mxu0 %v239
        %v454 = vpop.f32.mrb[0].mxu0
        %v455 = vadd.f32 0.0, %v454
        %v456 = vpop.f32.mrb[0].mxu0
        %v457 = vadd.f32 0.0, %v456
        %v458 = vpop.f32.mrb[0].mxu0
        %v459 = vadd.f32 0.0, %v458
        %v460 = vpop.f32.mrb[0].mxu0
        %v461 = vadd.f32 0.0, %v460
        %462 = vmatprep.mubr.bf16.mxu0 0
        %463 = vmatmul.mubr.bf16.gmra.mrb[0].mxu0 %v240
        %v464 = vpop.f32.mrb[0].mxu0
        %v465 = vadd.f32 0.0, %v464
        %v466 = vpop.f32.mrb[0].mxu0
        %v467 = vadd.f32 0.0, %v466
        %v468 = vpop.f32.mrb[0].mxu0
        %v469 = vadd.f32 0.0, %v468
        %v470 = vpop.f32.mrb[0].mxu0
        %v471 = vadd.f32 0.0, %v470
        %472 = vmatprep.mubr.bf16.mxu0 0
        %473 = vmatmul.mubr.bf16.gmra.mrb[0].mxu0 %v241
        %v474 = vpop.f32.mrb[0].mxu0
        %v475 = vadd.f32 0.0, %v474
        %v476 = vpop.f32.mrb[0].mxu0
        %v477 = vadd.f32 0.0, %v476
        %v478 = vpop.f32.mrb[0].mxu0
        %v479 = vadd.f32 0.0, %v478
        %v480 = vpop.f32.mrb[0].mxu0
        %v481 = vadd.f32 0.0, %v480
        %482 = vdwg.mxu0
        %483 = vst [vmem:[%s207] sm:$0xff] %v405
        %484 = vst [vmem:[%s207 + $0x8] sm:$0xff] %v407
        %485 = vst [vmem:[%s207 + $0x10] sm:$0xff] %v409
        %486 = vst [vmem:[%s207 + $0x18] sm:$0xff] %v411
        %487 = vst [vmem:[%s207 + $0x20] sm:$0xff] %v415
        %488 = vst [vmem:[%s207 + $0x28] sm:$0xff] %v417
        %489 = vst [vmem:[%s207 + $0x30] sm:$0xff] %v419
        %490 = vst [vmem:[%s207 + $0x38] sm:$0xff] %v421
        %491 = vst [vmem:[%s207 + $0x40] sm:$0xff] %v425
        %492 = vst [vmem:[%s207 + $0x48] sm:$0xff] %v427
        %493 = vst [vmem:[%s207 + $0x50] sm:$0xff] %v429
        %494 = vst [vmem:[%s207 + $0x58] sm:$0xff] %v431
        %495 = vst [vmem:[%s207 + $0x60] sm:$0xff] %v435
        %496 = vst [vmem:[%s207 + $0x68] sm:$0xff] %v437
        %497 = vst [vmem:[%s207 + $0x70] sm:$0xff] %v439
        %498 = vst [vmem:[%s207 + $0x78] sm:$0xff] %v441
        %499 = vst [vmem:[%s207 + $0x80] sm:$0xff] %v445
        %500 = vst [vmem:[%s207 + $0x88] sm:$0xff] %v447
        %501 = vst [vmem:[%s207 + $0x90] sm:$0xff] %v449
        %502 = vst [vmem:[%s207 + $0x98] sm:$0xff] %v451
        %503 = vst [vmem:[%s207 + $0xa0] sm:$0xff] %v455
        %504 = vst [vmem:[%s207 + $0xa8] sm:$0xff] %v457
        %505 = vst [vmem:[%s207 + $0xb0] sm:$0xff] %v459
        %506 = vst [vmem:[%s207 + $0xb8] sm:$0xff] %v461
        %507 = vst [vmem:[%s207 + $0xc0] sm:$0xff] %v465
        %508 = vst [vmem:[%s207 + $0xc8] sm:$0xff] %v467
        %509 = vst [vmem:[%s207 + $0xd0] sm:$0xff] %v469
        %510 = vst [vmem:[%s207 + $0xd8] sm:$0xff] %v471
        %511 = vst [vmem:[%s207 + $0xe0] sm:$0xff] %v475
        %512 = vst [vmem:[%s207 + $0xe8] sm:$0xff] %v477
        %513 = vst [vmem:[%s207 + $0xf0] sm:$0xff] %v479
        %514 = vst [vmem:[%s207 + $0xf8] sm:$0xff] %v481
        %v515 = vadd.f32 %v405, %v409
        %v516 = vadd.f32 %v515, %v415
        %v517 = vadd.f32 %v516, %v419
        %v518 = vadd.f32 %v517, %v425
        %v519 = vadd.f32 %v518, %v429
        %v520 = vadd.f32 %v519, %v435
        %v521 = vadd.f32 %v520, %v439
        %v522 = vadd.f32 %v521, %v445
        %v523 = vadd.f32 %v522, %v449
        %v524 = vadd.f32 %v523, %v455
        %v525 = vadd.f32 %v524, %v459
        %v526 = vadd.f32 %v525, %v465
        %v527 = vadd.f32 %v526, %v469
        %v528 = vadd.f32 %v527, %v475
        %v529 = vadd.f32 %v528, %v479
        %v530 = vrot.slane %v529, 4
        %v531 = vadd.f32 %v529, %v530
        %v532 = vrot.slane %v531, 2
        %v533 = vadd.f32 %v531, %v532
        %v534 = vrot.slane %v533, 1
        %v535 = vadd.f32 %v533, %v534
        %v536 = vadd.f32 %v407, %v411
        %v537 = vadd.f32 %v536, %v417
        %v538 = vadd.f32 %v537, %v421
        %v539 = vadd.f32 %v538, %v427
        %v540 = vadd.f32 %v539, %v431
        %v541 = vadd.f32 %v540, %v437
        %v542 = vadd.f32 %v541, %v441
        %v543 = vadd.f32 %v542, %v447
        %v544 = vadd.f32 %v543, %v451
        %v545 = vadd.f32 %v544, %v457
        %v546 = vadd.f32 %v545, %v461
        %v547 = vadd.f32 %v546, %v467
        %v548 = vadd.f32 %v547, %v471
        %v549 = vadd.f32 %v548, %v477
        %v550 = vadd.f32 %v549, %v481
        %v551 = vrot.slane %v550, 4
        %v552 = vadd.f32 %v550, %v551
        %v553 = vrot.slane %v552, 2
        %v554 = vadd.f32 %v552, %v553
        %v555 = vrot.slane %v554, 1
        %v556 = vadd.f32 %v554, %v555
        %v557 = vmul.f32 %v405, %v405
        %v558 = vmul.f32 %v407, %v407
        %v559 = vmul.f32 %v409, %v409
        %v560 = vmul.f32 %v411, %v411
        %v561 = vmul.f32 %v415, %v415
        %v562 = vmul.f32 %v417, %v417
        %v563 = vmul.f32 %v419, %v419
        %v564 = vmul.f32 %v421, %v421
        %v565 = vmul.f32 %v425, %v425
        %v566 = vmul.f32 %v427, %v427
        %v567 = vmul.f32 %v429, %v429
        %v568 = vmul.f32 %v431, %v431
        %v569 = vmul.f32 %v435, %v435
        %v570 = vmul.f32 %v437, %v437
        %v571 = vmul.f32 %v439, %v439
        %v572 = vmul.f32 %v441, %v441
        %v573 = vmul.f32 %v445, %v445
        %v574 = vmul.f32 %v447, %v447
        %v575 = vmul.f32 %v449, %v449
        %v576 = vmul.f32 %v451, %v451
        %v577 = vmul.f32 %v455, %v455
        %v578 = vmul.f32 %v457, %v457
        %v579 = vmul.f32 %v459, %v459
        %v580 = vmul.f32 %v461, %v461
        %v581 = vmul.f32 %v465, %v465
        %v582 = vmul.f32 %v467, %v467
        %v583 = vmul.f32 %v469, %v469
        %v584 = vmul.f32 %v471, %v471
        %v585 = vmul.f32 %v475, %v475
        %v586 = vmul.f32 %v477, %v477
        %v587 = vmul.f32 %v479, %v479
        %v588 = vmul.f32 %v481, %v481
        %v589 = vadd.f32 %v557, %v559
        %v590 = vadd.f32 %v589, %v561
        %v591 = vadd.f32 %v590, %v563
        %v592 = vadd.f32 %v591, %v565
        %v593 = vadd.f32 %v592, %v567
        %v594 = vadd.f32 %v593, %v569
        %v595 = vadd.f32 %v594, %v571
        %v596 = vadd.f32 %v595, %v573
        %v597 = vadd.f32 %v596, %v575
        %v598 = vadd.f32 %v597, %v577
        %v599 = vadd.f32 %v598, %v579
        %v600 = vadd.f32 %v599, %v581
        %v601 = vadd.f32 %v600, %v583
        %v602 = vadd.f32 %v601, %v585
        %v603 = vadd.f32 %v602, %v587
        %v604 = vrot.slane %v603, 4
        %v605 = vadd.f32 %v603, %v604
        %v606 = vrot.slane %v605, 2
        %v607 = vadd.f32 %v605, %v606
        %v608 = vrot.slane %v607, 1
        %v609 = vadd.f32 %v607, %v608
        %v610 = vadd.f32 %v558, %v560
        %v611 = vadd.f32 %v610, %v562
        %v612 = vadd.f32 %v611, %v564
        %v613 = vadd.f32 %v612, %v566
        %v614 = vadd.f32 %v613, %v568
        %v615 = vadd.f32 %v614, %v570
        %v616 = vadd.f32 %v615, %v572
        %v617 = vadd.f32 %v616, %v574
        %v618 = vadd.f32 %v617, %v576
        %v619 = vadd.f32 %v618, %v578
        %v620 = vadd.f32 %v619, %v580
        %v621 = vadd.f32 %v620, %v582
        %v622 = vadd.f32 %v621, %v584
        %v623 = vadd.f32 %v622, %v586
        %v624 = vadd.f32 %v623, %v588
        %v625 = vrot.slane %v624, 4
        %v626 = vadd.f32 %v624, %v625
        %v627 = vrot.slane %v626, 2
        %v628 = vadd.f32 %v626, %v627
        %v629 = vrot.slane %v628, 1
        %v630 = vadd.f32 %v628, %v629
        %vm631 = vcmask 1040384
        %v632 = vsel %vm631, %v535, %v609
        %v633 = vsel %vm631, %v556, %v630
        %v636 = vcombine.low %v632, %v633
        %v638 = vunpack.c.l.s4 1983009808
        %v639 = vunpack.c.0.s8 %v638
        %v640 = vlaneseq
        %v641 = vshrl.u32 %v640, 7
        %v642 = vsub.s32 %v639, %v641
        %v643 = vrot.slane %v636, %v642
        %645 = vst [vmem:[%s214] sm:$0xf] %v643
        %s646 = sand.u32 %s80, 1
        %s647 = scalar_lea.sflag [#allocation4], %s646
        %s648 = sand.u32 %s80, 1
        %s649 = smul.addr %s648, 256
        %s650 = scalar_lea.vmem [#allocation7], %s649
        %s651 = sand.u32 %s106, 1
        %s652 = scalar_lea.sflag [#allocation9], %s651
        %s653 = sand.u32 %s106, 1
        %s654 = smul.addr %s653, 4
        %s655 = scalar_lea.vmem [#allocation8], %s654
        // Predicated region
        $region37: #{tpu_custom_call.1} parent=27 // pred_check
          %p656 = pneg %p90
        $region38: #{tpu_custom_call.1} parent=27 // pred_check_branch
          %658 = sbr.rel (%p656) target = $region40
        $region39: #{tpu_custom_call.1} parent=27 // pred_region
          %s659 = smul.u32 16, %s25
          %s661 = ssub.s32 4096, 4096
          %662 = vsyncadd %s647, %s661
          %s663 = smul.addr %s659, 2
          %s664 = smul.addr %s663, 128
          %s665 = scalar_lea.hbm %s2, %s664
          %s666 = sshll.u32 %s650, 4
          %s667 = int_to_ptr.vmem [resolvable:$true] %s666
          %672 = dma.vmem_to_hbm [thread:$0]  %s667, 4096, %s665, %s647, 256, 256, 16
        $region40: #{tpu_custom_call.1} parent=27 // pred_fallthru
          _
        // Predicated region
        $region41: #{tpu_custom_call.1} parent=27 // pred_check
          %p673 = pneg %p116
        $region42: #{tpu_custom_call.1} parent=27 // pred_check_branch
          %675 = sbr.rel (%p673) target = $region44
        $region43: #{tpu_custom_call.1} parent=27 // pred_region
          %s677 = ssub.s32 64, 64
          %678 = vsyncadd %s652, %s677
          %s679 = smul.addr %s25, 2
          %s680 = smul.addr %s679, 32
          %s681 = scalar_lea.hbm %s3, %s680
          %s683 = sshll.u32 %s655, 4
          %s684 = int_to_ptr.vmem [resolvable:$true] %s683
          %686 = dma.vmem_to_hbm [thread:$0]  %s684, 64, %s681, %s652
        $region44: #{tpu_custom_call.1} parent=27 // pred_fallthru
          _
      $region28: #{tpu_custom_call.1} parent=5 // pred_fallthru
        _
      %p687 = scmp.le.s32.totalorder 2, %s20
      // Predicated region
      $region45: #{tpu_custom_call.1} parent=5 // pred_check
        %p688 = pneg %p687
      $region46: #{tpu_custom_call.1} parent=5 // pred_check_branch
        %690 = sbr.rel (%p688) target = $region48
      $region47: #{tpu_custom_call.1} parent=5 // pred_region
        %s691 = ssub.s32 %s20, 2
        // Predicated region
        $region49: #{tpu_custom_call.1} parent=47 // pred_check
          %p692 = pneg %p96
        $region50: #{tpu_custom_call.1} parent=47 // pred_check_branch
          %694 = sbr.rel (%p692) target = $region52
        $region51: #{tpu_custom_call.1} parent=47 // pred_region
          %s695 = sand.u32 %s81, 1
          %s696 = scalar_lea.sflag [#allocation4], %s695
          %s697 = sand.u32 %s81, 1
          %s698 = smul.addr %s697, 256
          %s699 = scalar_lea.vmem [#allocation7], %s698
          %700 = dma.done %s696, 4096
        $region52: #{tpu_custom_call.1} parent=47 // pred_fallthru
          _
        // Predicated region
        $region53: #{tpu_custom_call.1} parent=47 // pred_check
          %p701 = pneg %p122
        $region54: #{tpu_custom_call.1} parent=47 // pred_check_branch
          %703 = sbr.rel (%p701) target = $region56
        $region55: #{tpu_custom_call.1} parent=47 // pred_region
          %s704 = sand.u32 %s107, 1
          %s705 = scalar_lea.sflag [#allocation9], %s704
          %s706 = sand.u32 %s107, 1
          %s707 = smul.addr %s706, 4
          %s708 = scalar_lea.vmem [#allocation8], %s707
          %709 = dma.done %s705, 64
        $region56: #{tpu_custom_call.1} parent=47 // pred_fallthru
          _
      $region48: #{tpu_custom_call.1} parent=5 // pred_fallthru
        _
    $region6: #{tpu_custom_call.1} parent=1 // loop_footer
      %s24 = sadd.s32 1, %s20
    $region7: #{tpu_custom_call.1} parent=1 // loop_footer_branch
      %19 = sbr.rel target = $region3
    $region8: #{tpu_custom_call.1} parent=1 // loop_exit
      _
    %710 = vsyncpa [#allocation3], 1
    %s711 = scalar_lea.sflag [#allocation3], 1
    %712 = vsyncpa %s711, 1
    %713 = vsyncpa [#allocation6], 1
    %714 = vsyncpa [#allocation4], 1
    %s715 = scalar_lea.sflag [#allocation4], 1
    %716 = vsyncpa %s715, 1
    %717 = vsyncpa [#allocation9], 1
    %s718 = scalar_lea.sflag [#allocation9], 1
    %719 = vsyncpa %s718, 1

</llo_original>
